<compile_context>
chip_gen: v5e
topology: v5e:2x2
jax: 0.10.0
libtpu: 0.0.40
codegen_flags: <defaults>
</compile_context>

<pallas_src>
import functools

import jax
import jax.numpy as jnp
from jax.experimental import pallas as pl
from jax.experimental.pallas import tpu as pltpu


def _pixelnorm_kernel_spatial(x_ref, o_ref, *, epsilon):
    """Block = (1, C, tS): reduce over the channel (sublane) axis."""
    x = x_ref[...].astype(jnp.float32)                       # (1, C, tS)
    ms = jnp.mean(x * x, axis=1, keepdims=True)              # (1, 1, tS)
    y = x * jax.lax.rsqrt(ms + jnp.float32(epsilon))         # EUP rsqrt
    o_ref[...] = y.astype(o_ref.dtype)


def _pixelnorm_kernel_vector(x_ref, o_ref, *, epsilon):
    """Block = (tB, C): reduce over the channel (lane) axis."""
    x = x_ref[...].astype(jnp.float32)                       # (tB, C)
    ms = jnp.mean(x * x, axis=-1, keepdims=True)             # (tB, 1)
    y = x * jax.lax.rsqrt(ms + jnp.float32(epsilon))
    o_ref[...] = y.astype(o_ref.dtype)


def pixel_norm(x, epsilon=1e-8):
    """Pallas forward: x * rsqrt(mean(x**2, axis=1, keepdims=True) + eps)."""
    if x.ndim < 2:
        raise ValueError("PixelNorm expects at least 2 dims (batch, channels, ...)")

    orig_shape = x.shape
    n_elems = x.size
    bytes_accessed = 2 * x.size * x.dtype.itemsize  # read x + write y

    if x.ndim == 2:
        # Latent / mapping-network path: (B, C), reduce over lane axis.
        B, C = x.shape
        tB = B if (B <= 256 or B % 8 != 0) else 256
        grid = (pl.cdiv(B, tB),)
        kernel = functools.partial(_pixelnorm_kernel_vector, epsilon=epsilon)
        out = pl.pallas_call(
            kernel,
            out_shape=jax.ShapeDtypeStruct((B, C), x.dtype),
            grid=grid,
            in_specs=[pl.BlockSpec((tB, C), lambda i: (i, 0))],
            out_specs=pl.BlockSpec((tB, C), lambda i: (i, 0)),
            compiler_params=pltpu.CompilerParams(
                dimension_semantics=("parallel",)),
            cost_estimate=pl.CostEstimate(
                flops=3 * n_elems,
                transcendentals=B,
                bytes_accessed=bytes_accessed),
        )(x)
        return out

    # Feature-map path: (B, C, *spatial) -> (B, C, S); channels on sublanes,
    # spatial on the (lane-dense) last axis.
    B, C = x.shape[0], x.shape[1]
    S = 1
    for d in x.shape[2:]:
        S *= d
    x3 = x.reshape(B, C, S)

    # Spatial tile: multiple of 128 lanes when possible, else the full extent
    # (full-array block dims are always legal).
    if S % 128 == 0 and S > 2048:
        tS = 1024 if S % 1024 == 0 else 128
    else:
        tS = S
    grid = (B, pl.cdiv(S, tS))

    kernel = functools.partial(_pixelnorm_kernel_spatial, epsilon=epsilon)
    out = pl.pallas_call(
        kernel,
        out_shape=jax.ShapeDtypeStruct((B, C, S), x.dtype),
        grid=grid,
        in_specs=[pl.BlockSpec((1, C, tS), lambda b, s: (b, 0, s))],
        out_specs=pl.BlockSpec((1, C, tS), lambda b, s: (b, 0, s)),
        compiler_params=pltpu.CompilerParams(
            dimension_semantics=("parallel", "parallel")),
        cost_estimate=pl.CostEstimate(
            flops=3 * n_elems,
            transcendentals=B * S,
            bytes_accessed=bytes_accessed),
    )(x3)
    return out.reshape(orig_shape)


def _ref_pixel_norm(x, epsilon=1e-8):
    return x * jax.lax.rsqrt(jnp.mean(x ** 2, axis=1, keepdims=True) + epsilon)


if __name__ == "__main__":
    key = jax.random.PRNGKey(0)
    k4d, k2d = jax.random.split(key)

    # 4D feature-map case (as used after conv layers in StyleGAN/ProGAN).
    x = jax.random.normal(k4d, (2, 4, 16, 16), jnp.float32)
    y = jax.block_until_ready(pixel_norm(x, epsilon=1e-8))
    y_ref = _ref_pixel_norm(x)
    assert y.shape == x.shape
    assert jnp.allclose(y, y_ref, atol=1e-5, rtol=1e-5), \
        f"max err {jnp.max(jnp.abs(y - y_ref))}"

    # 2D latent-vector case (mapping-network input normalization).
    x2 = jax.random.normal(k2d, (8, 128), jnp.float32)
    y2 = jax.block_until_ready(pixel_norm(x2, epsilon=1e-8))
    y2_ref = _ref_pixel_norm(x2)
    assert jnp.allclose(y2, y2_ref, atol=1e-5, rtol=1e-5), \
        f"max err {jnp.max(jnp.abs(y2 - y2_ref))}"

    print("KERNEL_OK")
</pallas_src>

<mosaic_0001>
module attributes {stable_mosaic.version = 11 : i64} {
  func.func @_pixelnorm_kernel_spatial(%arg0: i32, %arg1: i32, %arg2: memref<1x4x256xf32, #tpu.memory_space<vmem>>, %arg3: memref<1x4x256xf32, #tpu.memory_space<vmem>>) attributes {dimension_semantics = [#tpu.dimension_semantics<parallel>, #tpu.dimension_semantics<parallel>], iteration_bounds = array<i64: 2, 1>, scalar_prefetch = 0 : i64, scratch_operands = 0 : i64, tpu.core_type = #tpu.core_type<tc>, window_params = [{transform_indices = @transform_0, window_bounds = array<i64: 1, 4, 256>}, {transform_indices = @transform_1, window_bounds = array<i64: 1, 4, 256>}]} {
    %c0 = arith.constant 0 : index
    %c0_0 = arith.constant 0 : index
    %c0_1 = arith.constant 0 : index
    %0 = vector.load %arg2[%c0, %c0_0, %c0_1] : memref<1x4x256xf32, #tpu.memory_space<vmem>>, vector<1x4x256xf32>
    %1 = arith.mulf %0, %0 : vector<1x4x256xf32>
    %cst = arith.constant dense<0.000000e+00> : vector<1x256xf32>
    %2 = vector.multi_reduction <add>, %1, %cst [1] : vector<1x4x256xf32> to vector<1x256xf32>
    %3 = vector.shape_cast %2 : vector<1x256xf32> to vector<1x1x256xf32>
    %cst_2 = arith.constant 4.000000e+00 : f32
    %4 = vector.broadcast %cst_2 : f32 to vector<1x1x256xf32>
    %5 = arith.divf %3, %4 : vector<1x1x256xf32>
    %cst_3 = arith.constant 9.99999993E-9 : f32
    %6 = vector.broadcast %cst_3 : f32 to vector<1x1x256xf32>
    %7 = arith.addf %5, %6 : vector<1x1x256xf32>
    %8 = math.rsqrt %7 : vector<1x1x256xf32>
    %9 = vector.broadcast %8 : vector<1x1x256xf32> to vector<1x4x256xf32>
    %10 = arith.mulf %0, %9 : vector<1x4x256xf32>
    %c0_4 = arith.constant 0 : index
    %c0_5 = arith.constant 0 : index
    %c0_6 = arith.constant 0 : index
    %11 = vector.load %arg3[%c0_4, %c0_5, %c0_6] : memref<1x4x256xf32, #tpu.memory_space<vmem>>, vector<1x4x256xf32>
    tpu.vector_store %arg3[%c0_4, %c0_5, %c0_6], %10 {strides = array<i32>} : memref<1x4x256xf32, #tpu.memory_space<vmem>>, vector<1x4x256xf32>,
    return
  }
  func.func @transform_0(%arg0: i32, %arg1: i32) -> (i32, i32, i32) {
    %c0_i32 = arith.constant 0 : i32
    %c0_i32_0 = arith.constant 0 : i32
    return %arg0, %c0_i32, %arg1 : i32, i32, i32
  }
  func.func @transform_1(%arg0: i32, %arg1: i32) -> (i32, i32, i32) {
    %c0_i32 = arith.constant 0 : i32
    %c0_i32_0 = arith.constant 0 : i32
    return %arg0, %c0_i32, %arg1 : i32, i32, i32
  }
}

</mosaic_0001>

<llo_original>
// kernel: tpu_custom_call.1
$region0: #{tpu_custom_call.1}
  #allocation0 [shape = 'u32[]', space=smem, size = 0x4, offset = 0x4, fixed_abs, tag = 'smem constant byte address 0x4 - core index']
  #allocation1 [shape = 'u32[72,128]{1,0:T(1,128)}', space=vmem, size = 0x9000, scoped, tag = 'internal scratch']
  %s0 = inlined_call_operand.hbm [shape: f32[2,4,256], index: 0, kind: input, shape index: {}]
  %s1 = inlined_call_operand.hbm [shape: f32[2,4,256], index: 1, kind: output, shape index: {}]
  %s2 = sld [smem:[#allocation0]]
  $region41: #{tpu_custom_call.1} parent=0
    _
  %s4 = ssub.s32 1, %s2
  %s5 = scalar_select 0, %s4, %s2
  $region1: #{tpu_custom_call.1} parent=0
    #allocation2 [shape = 'u8[8192]{0}', space=vmem, size = 0x2000, scoped, tag = 'input window, operand 0']
    #allocation3 [shape = 's32[2]{0}', space=sflag, size = 0x8, scoped, tag = 'scoped memory for tpu_custom_call.1']
    #allocation4 [shape = 's32[2]{0}', space=sflag, size = 0x8, scoped, tag = 'scoped memory for tpu_custom_call.1']
    #allocation5 [shape = 'u8[8192]{0}', space=vmem, size = 0x2000, scoped, tag = 'output window, operand 0']
    %6 = vsyncpa [#allocation3], 0
    %s7 = scalar_lea.sflag [#allocation3], 1
    %8 = vsyncpa %s7, 0
    %9 = vsyncpa [#allocation4], 0
    %s10 = scalar_lea.sflag [#allocation4], 1
    %11 = vsyncpa %s10, 0
    loop: start=0, step=1, limit=4
    $region2: #{tpu_custom_call.1} parent=1 // loop_pre_header
      _
    $region3: #{tpu_custom_call.1} parent=1 // loop_header
      %s13 = sphi 0, %s17
      %p14 = scmp.ge.s32.totalorder %s13, 4
      %s20 = sphi 0, %s32
      %s21 = sphi 0, %s28
      %s22 = sphi 0, %s20
      %s23 = sphi 0, %s21
      %s24 = sphi 0, %s22
      %s25 = sphi 0, %s23
      %s37 = sphi 0, %s39
      %s40 = sphi 0, %s37
      %s41 = sphi 0, %s40
      %s57 = sphi 0, %s41
      %s65 = sphi 0, %s67
      %s68 = sphi 0, %s65
      %s69 = sphi 0, %s68
      %s85 = sphi 0, %s69
    $region4: #{tpu_custom_call.1} parent=1 // loop_header_branch
      %16 = sbr.rel (%p14) target = $region8
    $region5: #{tpu_custom_call.1} parent=1 // loop_body
      %s18 = ssub.s32 %s13, 1
      %s19 = ssub.s32 %s13, 2
      %s26 = sadd.s32 1, %s21
      %p27 = scmp.ge.s32.totalorder %s26, 1
      %s28 = scalar_select %p27, 0, %s26
      %s29 = sadd.s32 1, %s20
      %s30 = scalar_select %p27, %s29, %s20
      %p31 = scmp.ge.s32.totalorder %s30, 2
      %s32 = scalar_select %p31, 0, %s30
      %s33 = ssub.s32 %s20, %s32
      %s34 = ssub.s32 %s21, %s28
      %s35 = sor.u32 %s33, %s34
      %p36 = scmp.eq.s32.totalorder %s35, 0
      %s38 = sadd.s32 %s37, 1
      %s39 = scalar_select %p36, %s37, %s38
      %p42 = pneg %p36
      %p43 = scmp.eq.s32.totalorder %s13, 1
      %p44 = por %p42, %p43
      %p45 = scmp.ne.s32.totalorder %s37, %s40
      %p46 = scmp.eq.s32.totalorder %s13, 0
      %p47 = por %p45, %p46
      %p48 = scmp.ne.s32.totalorder %s37, %s40
      %p49 = scmp.eq.s32.totalorder %s18, 1
      %p50 = por %p48, %p49
      %p51 = scmp.ne.s32.totalorder %s40, %s41
      %p52 = scmp.eq.s32.totalorder %s18, 0
      %p53 = por %p51, %p52
      %p54 = scmp.ne.s32.totalorder %s40, %s41
      %p55 = scmp.eq.s32.totalorder %s19, 1
      %p56 = por %p54, %p55
      %p58 = scmp.ne.s32.totalorder %s41, %s57
      %p59 = scmp.eq.s32.totalorder %s19, 0
      %p60 = por %p58, %p59
      %s61 = ssub.s32 %s20, %s32
      %s62 = ssub.s32 %s21, %s28
      %s63 = sor.u32 %s61, %s62
      %p64 = scmp.eq.s32.totalorder %s63, 0
      %s66 = sadd.s32 %s65, 1
      %s67 = scalar_select %p64, %s65, %s66
      %p70 = pneg %p64
      %p71 = scmp.eq.s32.totalorder %s13, 1
      %p72 = por %p70, %p71
      %p73 = scmp.ne.s32.totalorder %s65, %s68
      %p74 = scmp.eq.s32.totalorder %s13, 0
      %p75 = por %p73, %p74
      %p76 = scmp.ne.s32.totalorder %s65, %s68
      %p77 = scmp.eq.s32.totalorder %s18, 1
      %p78 = por %p76, %p77
      %p79 = scmp.ne.s32.totalorder %s68, %s69
      %p80 = scmp.eq.s32.totalorder %s18, 0
      %p81 = por %p79, %p80
      %p82 = scmp.ne.s32.totalorder %s68, %s69
      %p83 = scmp.eq.s32.totalorder %s19, 1
      %p84 = por %p82, %p83
      %p86 = scmp.ne.s32.totalorder %s69, %s85
      %p87 = scmp.eq.s32.totalorder %s19, 0
      %p88 = por %p86, %p87
      %p89 = scmp.le.s32.totalorder 1, %s13
      %p90 = scmp.lt.s32.totalorder %s13, 3
      %p91 = pnand %p89, %p90
      %p92 = pneg %p91
      // Predicated region
      $region9: #{tpu_custom_call.1} parent=5 // pred_check
        _
      $region10: #{tpu_custom_call.1} parent=5 // pred_check_branch
        %94 = sbr.rel (%p91) target = $region12
      $region11: #{tpu_custom_call.1} parent=5 // pred_region
        %s95 = ssub.s32 %s13, 1
      $region12: #{tpu_custom_call.1} parent=5 // pred_fallthru
        _
      %p96 = scmp.lt.s32.totalorder %s13, 2
      // Predicated region
      $region13: #{tpu_custom_call.1} parent=5 // pred_check
        %p97 = pneg %p96
      $region14: #{tpu_custom_call.1} parent=5 // pred_check_branch
        %99 = sbr.rel (%p97) target = $region16
      $region15: #{tpu_custom_call.1} parent=5 // pred_region
        // Predicated region
        $region17: #{tpu_custom_call.1} parent=15 // pred_check
          %p100 = pneg %p47
        $region18: #{tpu_custom_call.1} parent=15 // pred_check_branch
          %102 = sbr.rel (%p100) target = $region20
        $region19: #{tpu_custom_call.1} parent=15 // pred_region
          %s103 = sand.u32 %s37, 1
          %s104 = scalar_lea.sflag [#allocation3], %s103
          %s105 = sand.u32 %s37, 1
          %s106 = smul.addr %s105, 8
          %s107 = scalar_lea.vmem [#allocation2], %s106
          %s108 = smul.u32 2, %s21
          %110 = vsyncadd %s104, 0
          %s111 = smul.addr %s20, 2
          %s112 = sadd.s32 %s108, %s111
          %s113 = smul.addr %s112, 4
          %s114 = scalar_lea.hbm %s0, %s113
          %s116 = sshll.u32 %s114, 4
          %s117 = int_to_ptr.hbm [resolvable:$true] %s116
          %s118 = sshll.u32 %s107, 4
          %s119 = int_to_ptr.vmem [resolvable:$true] %s118
          %121 = dma.hbm_to_vmem [thread:$0]  %s117, 128, %s119, %s104
        $region20: #{tpu_custom_call.1} parent=15 // pred_fallthru
          _
      $region16: #{tpu_custom_call.1} parent=5 // pred_fallthru
        _
      %p122 = scmp.le.s32.totalorder 1, %s13
      %p123 = scmp.lt.s32.totalorder %s13, 3
      %p124 = pnand %p122, %p123
      %p125 = pneg %p124
      // Predicated region
      $region21: #{tpu_custom_call.1} parent=5 // pred_check
        _
      $region22: #{tpu_custom_call.1} parent=5 // pred_check_branch
        %127 = sbr.rel (%p124) target = $region24
      $region23: #{tpu_custom_call.1} parent=5 // pred_region
        %s128 = ssub.s32 %s13, 1
        %s129 = sand.u32 %s40, 1
        %s130 = scalar_lea.sflag [#allocation3], %s129
        %s131 = sand.u32 %s40, 1
        %s132 = smul.addr %s131, 8
        %s133 = scalar_lea.vmem [#allocation2], %s132
        // Predicated region
        $region25: #{tpu_custom_call.1} parent=23 // pred_check
          %p134 = pneg %p53
        $region26: #{tpu_custom_call.1} parent=23 // pred_check_branch
          %136 = sbr.rel (%p134) target = $region28
        $region27: #{tpu_custom_call.1} parent=23 // pred_region
          %138 = dma.done %s130, 128
        $region28: #{tpu_custom_call.1} parent=23 // pred_fallthru
          _
        %s139 = sand.u32 %s40, 1
        %s140 = scalar_lea.sflag [#allocation3], %s139
        %s141 = sand.u32 %s40, 1
        %s142 = smul.addr %s141, 8
        %s143 = scalar_lea.vmem [#allocation2], %s142
        %p144 = pneg %p53
        %p145 = pneg %p50
        %p146 = pneg %p81
        %p147 = pneg %p78
        %s148 = sand.u32 %s68, 1
        %s149 = scalar_lea.sflag [#allocation4], %s148
        %s150 = sand.u32 %s68, 1
        %s151 = smul.addr %s150, 8
        %s152 = scalar_lea.vmem [#allocation5], %s151
        %s153 = smul.u32 2, %s23
        %s154 = smul.u32 2, %s23
        %v155 = vld [vmem:[%s133] sm:$0xff]
        %v156 = vmul.f32 %v155, %v155
        %158 = vst [vmem:[#allocation1] ss:$2 sm:$0xff] %v156
        %v159 = vld.sshfl [vmem:[#allocation1] sm:$0xff pattern:$0x75316420]
        %v160 = vld.sshfl [vmem:[#allocation1 + $0x8] sm:$0xff pattern:$0x75316420]
        %vm163 = vcmask 1043456
        %v164 = vsel %vm163, %v159, 0.0
        %v165 = vrot.slane %v164, 4
        %v166 = vadd.f32 %v164, %v165
        %v167 = vrot.slane %v166, 2
        %v168 = vadd.f32 %v166, %v167
        %v169 = vrot.slane %v168, 1
        %v170 = vadd.f32 %v168, %v169
        %v171 = vsel %vm163, %v160, 0.0
        %v172 = vrot.slane %v171, 4
        %v173 = vadd.f32 %v171, %v172
        %v174 = vrot.slane %v173, 2
        %v175 = vadd.f32 %v173, %v174
        %v176 = vrot.slane %v175, 1
        %v177 = vadd.f32 %v175, %v176
        %v178 = vrcp.pop 4.0
        %v179 = vmul.f32 4.0, %v178
        %v180 = vsub.f32 1.0, %v179
        %v181 = vmul.f32 %v178, %v180
        %v182 = vadd.f32 %v178, %v181
        %vm183 = vweird.f32 %v178
        %v184 = vsel %vm183, %v178, %v182
        %v185 = vmul.f32 %v170, %v184
        %v186 = vmul.f32 %v177, %v184
        %v187 = vadd.f32 %v185, 1e-08
        %v188 = vadd.f32 %v186, 1e-08
        %v189 = vrsqrt.pop %v187
        %v190 = vmul.f32 %v189, %v187
        %v191 = vmul.f32 %v190, %v189
        %v192 = vmul.f32 0.5, %v191
        %v193 = vsub.f32 1.5, %v192
        %v194 = vmul.f32 %v189, %v193
        %vm195 = vweird.f32 %v187
        %vm196 = vweird.f32 %v189
        %vm197 = vmor %vm195, %vm196
        %v198 = vsel %vm197, %v189, %v194
        %v199 = vrsqrt.pop %v188
        %v200 = vmul.f32 %v199, %v188
        %v201 = vmul.f32 %v200, %v199
        %v202 = vmul.f32 0.5, %v201
        %v203 = vsub.f32 1.5, %v202
        %v204 = vmul.f32 %v199, %v203
        %vm205 = vweird.f32 %v188
        %vm206 = vweird.f32 %v199
        %vm207 = vmor %vm205, %vm206
        %v208 = vsel %vm207, %v199, %v204
        %v211 = vrot.slane %v208, 4
        %v212 = vsel %vm163, %v198, %v211
        %v214 = vmul.f32 %v155, %v212
        %215 = vst [vmem:[%s152] sm:$0xff] %v214
        %s216 = sand.u32 %s68, 1
        %s217 = scalar_lea.sflag [#allocation4], %s216
        %s218 = sand.u32 %s68, 1
        %s219 = smul.addr %s218, 8
        %s220 = scalar_lea.vmem [#allocation5], %s219
        // Predicated region
        $region29: #{tpu_custom_call.1} parent=23 // pred_check
          %p221 = pneg %p78
        $region30: #{tpu_custom_call.1} parent=23 // pred_check_branch
          %223 = sbr.rel (%p221) target = $region32
        $region31: #{tpu_custom_call.1} parent=23 // pred_region
          %s224 = smul.u32 2, %s23
          %226 = vsyncadd %s217, 0
          %s227 = smul.addr %s22, 2
          %s228 = sadd.s32 %s224, %s227
          %s229 = smul.addr %s228, 4
          %s230 = scalar_lea.hbm %s1, %s229
          %s232 = sshll.u32 %s220, 4
          %s233 = int_to_ptr.vmem [resolvable:$true] %s232
          %s234 = sshll.u32 %s230, 4
          %s235 = int_to_ptr.hbm [resolvable:$true] %s234
          %237 = dma.vmem_to_hbm [thread:$0]  %s233, 128, %s235, %s217
        $region32: #{tpu_custom_call.1} parent=23 // pred_fallthru
          _
      $region24: #{tpu_custom_call.1} parent=5 // pred_fallthru
        _
      %p238 = scmp.le.s32.totalorder 2, %s13
      // Predicated region
      $region33: #{tpu_custom_call.1} parent=5 // pred_check
        %p239 = pneg %p238
      $region34: #{tpu_custom_call.1} parent=5 // pred_check_branch
        %241 = sbr.rel (%p239) target = $region36
      $region35: #{tpu_custom_call.1} parent=5 // pred_region
        %s242 = ssub.s32 %s13, 2
        // Predicated region
        $region37: #{tpu_custom_call.1} parent=35 // pred_check
          %p243 = pneg %p84
        $region38: #{tpu_custom_call.1} parent=35 // pred_check_branch
          %245 = sbr.rel (%p243) target = $region40
        $region39: #{tpu_custom_call.1} parent=35 // pred_region
          %s246 = sand.u32 %s69, 1
          %s247 = scalar_lea.sflag [#allocation4], %s246
          %s248 = sand.u32 %s69, 1
          %s249 = smul.addr %s248, 8
          %s250 = scalar_lea.vmem [#allocation5], %s249
          %252 = dma.done %s247, 128
        $region40: #{tpu_custom_call.1} parent=35 // pred_fallthru
          _
      $region36: #{tpu_custom_call.1} parent=5 // pred_fallthru
        _
    $region6: #{tpu_custom_call.1} parent=1 // loop_footer
      %s17 = sadd.s32 1, %s13
    $region7: #{tpu_custom_call.1} parent=1 // loop_footer_branch
      %12 = sbr.rel target = $region3
    $region8: #{tpu_custom_call.1} parent=1 // loop_exit
      _
    %253 = vsyncpa [#allocation3], 1
    %s254 = scalar_lea.sflag [#allocation3], 1
    %255 = vsyncpa %s254, 1
    %256 = vsyncpa [#allocation4], 1
    %s257 = scalar_lea.sflag [#allocation4], 1
    %258 = vsyncpa %s257, 1

</llo_original>
